<compile_context>
chip_gen: v7x
topology: tpu7x:2x2x1
jax: 0.10.0
libtpu: 0.0.40
codegen_flags: <defaults>
</compile_context>

<pallas_src>
import math

import jax
import jax.numpy as jnp
from jax import lax
from jax.experimental import pallas as pl
from jax.experimental.pallas import tpu as pltpu

_LANE = 128


def _round_up(x, m):
    return ((x + m - 1) // m) * m


def _ctrnn_kernel(u_ref, h0_ref, w_ref, decay_ref, inv_tau_ref,
                  out_ref, h_scratch):
    """One grid step == one chunk of T timesteps for one batch tile.

    Per timestep:  h = (1 - 1/tau) * h + (1/tau) * relu(h @ W + u_t)
    which equals   h + (1/tau) * (-h + relu(h @ W + x_t @ W_in + b)).
    """
    # (Re-)initialize the carried hidden state at the start of each batch
    # tile's time sweep (time is the innermost, sequential grid axis).
    @pl.when(pl.program_id(1) == 0)
    def _():
        h_scratch[...] = h0_ref[...]

    b_blk, h_pad = h_scratch.shape

    # Hoist the (1, H) -> (b_blk, H) broadcasts out of the time loop
    # (JAX does not CSE broadcast_in_dim).
    decay = jnp.broadcast_to(decay_ref[...], (b_blk, h_pad))
    inv_tau = jnp.broadcast_to(inv_tau_ref[...], (b_blk, h_pad))

    n_t = u_ref.shape[0]

    def step(t, h):
        # Recurrent matmul: bf16 (or f32) operands, f32 accumulation on MXU.
        pre = jnp.dot(h.astype(w_ref.dtype), w_ref[...],
                      preferred_element_type=jnp.float32) + u_ref[t]
        h = decay * h + inv_tau * jnp.maximum(pre, 0.0)
        out_ref[t] = h                       # full (b_blk, H) tile store
        return h

    # fori_loop bounds vreg live ranges (W is not pinned across a deep static
    # unroll); a small unroll keeps LLO scheduler visibility.
    h = lax.fori_loop(0, n_t, step, h_scratch[...],
                      unroll=max(1, min(8, n_t)))

    h_scratch[...] = h                       # carry into the next time chunk


def _pick_batch_block(batch, max_block=256):
    """Multiple-of-8 divisor of `batch` (or `batch` itself), preferring >= 2
    tiles so v7x's second TensorCore gets work, capped near MXU row height."""
    if batch <= 8 or batch % 8 != 0:
        return batch
    divisors = [b for b in range(8, min(batch, max_block) + 1, 8)
                if batch % b == 0]
    if not divisors:
        return batch
    two_tile = [b for b in divisors if batch // b >= 2]
    return max(two_tile) if two_tile else max(divisors)


def _vmem_footprint(b_blk, t_blk, h_pad, w_itemsize):
    slab = b_blk * t_blk * h_pad * 4
    return (4 * slab                              # 2x u + 2x out buffers
            + 2 * h_pad * h_pad * w_itemsize      # W (double-buffered)
            + 2 * (2 * h_pad * 4)                 # decay + inv_tau (x2 buf)
            + 2 * b_blk * h_pad * 4               # h0 (x2 buf)
            + b_blk * h_pad * 4)                  # h scratch


def _pick_time_block(seq_len, b_blk, h_pad, w_itemsize,
                     vmem_data_budget=32 * 1024 * 1024, max_block=256):
    """Largest divisor of seq_len (<= max_block) whose streamed slabs fit the
    VMEM data budget.  Time is the *leading* block axis, so t_blk needs no
    (8,128) alignment — any divisor of seq_len is legal."""
    fixed = _vmem_footprint(b_blk, 0, h_pad, w_itemsize)
    per_t = 4 * b_blk * h_pad * 4                 # u + out, double-buffered
    cap = max(1, min(max_block, (vmem_data_budget - fixed) // per_t))
    if seq_len <= cap:
        return seq_len
    for t in range(int(cap), 0, -1):
        if seq_len % t == 0:
            return t
    return 1


def simple_ctrnn_forward(x, weight, input_weight, bias, tau, h0=None, *,
                         time_block=None, batch_block=None,
                         recurrent_dtype=jnp.bfloat16):
    """x: (batch, seq_len, input_size) -> (batch, seq_len, hidden) float32."""
    x = x.astype(jnp.float32)
    batch, seq_len, _ = x.shape
    hidden = weight.shape[0]
    h_pad = max(_LANE, _round_up(hidden, _LANE))

    weight = weight.astype(jnp.float32)
    input_weight = input_weight.astype(jnp.float32)
    bias = bias.astype(jnp.float32).reshape(1, hidden)
    tau = tau.astype(jnp.float32).reshape(1, hidden)

    if h0 is None:
        h0 = jnp.zeros((batch, hidden), jnp.float32)
    h0 = h0.astype(jnp.float32)

    # Precompute 1/tau and (1 - 1/tau) once, off the per-step critical path.
    inv_tau = 1.0 / tau
    decay = 1.0 - inv_tau

    # Zero-pad the hidden/lane dimension to a multiple of 128 so every vector
    # op / MXU column / store is full-width and unmasked.  Padded lanes stay
    # exactly zero (zero W columns, zero bias, zero h0).
    pad_h = h_pad - hidden
    if pad_h:
        weight = jnp.pad(weight, ((0, pad_h), (0, pad_h)))
        input_weight = jnp.pad(input_weight, ((0, 0), (0, pad_h)))
        bias = jnp.pad(bias, ((0, 0), (0, pad_h)))
        inv_tau = jnp.pad(inv_tau, ((0, 0), (0, pad_h)))
        decay = jnp.pad(decay, ((0, 0), (0, pad_h)))
        h0 = jnp.pad(h0, ((0, 0), (0, pad_h)))

    # Hoisted, non-recurrent input projection as one large XLA matmul, emitted
    # directly in the time-leading (seq, batch, hidden) layout the kernel
    # streams, so per-timestep loads/stores are full (b_blk, H) tiles.
    u = jnp.einsum('bsi,ih->sbh', x, input_weight,
                   precision=lax.Precision.HIGHEST) + bias

    w = weight.astype(recurrent_dtype)
    w_itemsize = jnp.dtype(recurrent_dtype).itemsize

    b_blk = batch_block if batch_block is not None else _pick_batch_block(batch)
    assert batch % b_blk == 0, "batch_block must divide batch"
    assert b_blk == batch or b_blk % 8 == 0, \
        "batch_block must be a multiple of 8 (or the full batch)"

    t_blk = (time_block if time_block is not None
             else _pick_time_block(seq_len, b_blk, h_pad, w_itemsize))
    assert seq_len % t_blk == 0, "time_block must divide seq_len"

    grid = (batch // b_blk, seq_len // t_blk)

    vmem_limit = int(min(
        max(_vmem_footprint(b_blk, t_blk, h_pad, w_itemsize) + (8 << 20),
            16 << 20),
        48 << 20))

    out = pl.pallas_call(
        _ctrnn_kernel,
        out_shape=jax.ShapeDtypeStruct((seq_len, batch, h_pad), jnp.float32),
        grid_spec=pltpu.PrefetchScalarGridSpec(
            num_scalar_prefetch=0,
            grid=grid,
            in_specs=[
                # u: one (t_blk, b_blk, H) slab per grid step (time leading)
                pl.BlockSpec((t_blk, b_blk, h_pad), lambda b, t: (t, b, 0)),
                # h0: per batch tile
                pl.BlockSpec((b_blk, h_pad), lambda b, t: (b, 0)),
                # recurrent weight + tau terms: resident across the whole grid
                pl.BlockSpec((h_pad, h_pad), lambda b, t: (0, 0)),
                pl.BlockSpec((1, h_pad), lambda b, t: (0, 0)),
                pl.BlockSpec((1, h_pad), lambda b, t: (0, 0)),
            ],
            out_specs=pl.BlockSpec((t_blk, b_blk, h_pad),
                                   lambda b, t: (t, b, 0)),
            scratch_shapes=[pltpu.VMEM((b_blk, h_pad), jnp.float32)],
        ),
        compiler_params=pltpu.CompilerParams(
            # batch tiles are independent (v7x megacore); time is sequential.
            dimension_semantics=("parallel", "arbitrary"),
            vmem_limit_bytes=vmem_limit,
        ),
    )(u, h0, w, decay, inv_tau)

    # One XLA transpose back to the PyTorch (batch, seq, hidden) layout, and
    # drop the lane padding.
    return jnp.transpose(out, (1, 0, 2))[:, :, :hidden]


def _reference_forward(x, weight, input_weight, bias, tau, h0=None):
    """Plain-JAX reference matching the PyTorch module exactly."""
    batch, seq_len, _ = x.shape
    hidden = weight.shape[0]
    h = jnp.zeros((batch, hidden), jnp.float32) if h0 is None else h0
    hp = lax.Precision.HIGHEST
    outs = []
    for i in range(seq_len):
        pre = (jnp.dot(h, weight, precision=hp)
               + jnp.dot(x[:, i, :], input_weight, precision=hp)
               + bias)
        h = h + 1.0 / tau * (-h + jax.nn.relu(pre))
        outs.append(h[:, None, :])
    return jnp.concatenate(outs, axis=1)


if __name__ == "__main__":
    input_size = 4
    hidden_size = 32
    batch = 2
    seq_len = 8

    key = jax.random.PRNGKey(0)
    k_bias, k_w, k_wi, k_tau, k_x = jax.random.split(key, 5)

    # Shapes match the PyTorch module; scales are chosen so the recurrence is
    # numerically stable (raw randn-scale W with tau << 1 explodes the state
    # by ~1e8 over 8 steps, which would amplify benign rounding differences
    # far past any tolerance and make the correctness check meaningless).
    bias = jax.random.normal(k_bias, (1, hidden_size), jnp.float32)
    weight = jax.random.normal(k_w, (hidden_size, hidden_size),
                               jnp.float32) * (0.3 / math.sqrt(hidden_size))
    input_weight = jax.random.normal(k_wi, (input_size, hidden_size),
                                     jnp.float32) / math.sqrt(input_size)
    tau = jnp.abs(jax.random.normal(k_tau, (1, hidden_size),
                                    jnp.float32)) + 1.0
    x = jax.random.normal(k_x, (batch, seq_len, input_size), jnp.float32)

    ref = _reference_forward(x, weight, input_weight, bias, tau)

    # 1) Semantics check: f32 recurrent matmul vs HIGHEST-precision reference.
    out_f32 = jax.block_until_ready(simple_ctrnn_forward(
        x, weight, input_weight, bias, tau, recurrent_dtype=jnp.float32))
    assert out_f32.shape == (batch, seq_len, hidden_size)
    err_f32 = float(jnp.max(jnp.abs(out_f32 - ref)))
    assert jnp.allclose(out_f32, ref, atol=1e-2, rtol=1e-2), (
        f"f32 kernel mismatch vs reference: max abs err = {err_f32}")

    # 2) Default path (bf16-operand MXU matmul, f32 accumulate): tolerance
    #    reflects bf16 operand rounding on the recurrent matmul only; any
    #    semantic error would show up as O(1) differences.
    out = jax.block_until_ready(simple_ctrnn_forward(
        x, weight, input_weight, bias, tau))
    assert out.shape == (batch, seq_len, hidden_size)
    err_bf16 = float(jnp.max(jnp.abs(out - ref)))
    assert jnp.allclose(out, ref, atol=5e-2, rtol=5e-2), (
        f"bf16 kernel mismatch vs reference: max abs err = {err_bf16}")

    print("KERNEL_OK")
</pallas_src>

<mosaic_0001>
module attributes {stable_mosaic.version = 11 : i64} {
  func.func @_ctrnn_kernel(%arg0: i32, %arg1: i32, %arg2: memref<8x2x128xf32, #tpu.memory_space<vmem>>, %arg3: memref<2x128xf32, #tpu.memory_space<vmem>>, %arg4: memref<128x128xf32, #tpu.memory_space<vmem>>, %arg5: memref<1x128xf32, #tpu.memory_space<vmem>>, %arg6: memref<1x128xf32, #tpu.memory_space<vmem>>, %arg7: memref<8x2x128xf32, #tpu.memory_space<vmem>>, %arg8: memref<2x128xf32, #tpu.memory_space<vmem>>) attributes {dimension_semantics = [#tpu.dimension_semantics<parallel>, #tpu.dimension_semantics<arbitrary>], iteration_bounds = array<i64: 1, 1>, scalar_prefetch = 0 : i64, scratch_operands = 1 : i64, tpu.core_type = #tpu.core_type<tc>, window_params = [{transform_indices = @transform_0, window_bounds = array<i64: 8, 2, 128>}, {transform_indices = @transform_1, window_bounds = array<i64: 2, 128>}, {pipeline_mode = #tpu.pipeline_mode<synchronous>, transform_indices = @transform_2, window_bounds = array<i64: 128, 128>}, {pipeline_mode = #tpu.pipeline_mode<synchronous>, transform_indices = @transform_3, window_bounds = array<i64: 1, 128>}, {pipeline_mode = #tpu.pipeline_mode<synchronous>, transform_indices = @transform_4, window_bounds = array<i64: 1, 128>}, {transform_indices = @transform_5, window_bounds = array<i64: 8, 2, 128>}]} {
    %c0_i32 = arith.constant 0 : i32
    %0 = arith.cmpi eq, %arg1, %c0_i32 : i32
    %1 = arith.extui %0 : i1 to i32
    %c0_i32_0 = arith.constant 0 : i32
    %2 = arith.cmpi ne, %1, %c0_i32_0 : i32
    scf.if %2 {
      %c0_72 = arith.constant 0 : index
      %c0_73 = arith.constant 0 : index
      %131 = vector.load %arg3[%c0_72, %c0_73] : memref<2x128xf32, #tpu.memory_space<vmem>>, vector<2x128xf32>
      %c0_74 = arith.constant 0 : index
      %c0_75 = arith.constant 0 : index
      %132 = vector.load %arg8[%c0_74, %c0_75] : memref<2x128xf32, #tpu.memory_space<vmem>>, vector<2x128xf32>
      tpu.vector_store %arg8[%c0_74, %c0_75], %131 {strides = array<i32>} : memref<2x128xf32, #tpu.memory_space<vmem>>, vector<2x128xf32>,
    } else {
    }
    %c0 = arith.constant 0 : index
    %c0_1 = arith.constant 0 : index
    %3 = vector.load %arg5[%c0, %c0_1] : memref<1x128xf32, #tpu.memory_space<vmem>>, vector<1x128xf32>
    %4 = vector.shape_cast %3 : vector<1x128xf32> to vector<1x128xf32>
    %5 = vector.broadcast %4 : vector<1x128xf32> to vector<2x128xf32>
    %c0_2 = arith.constant 0 : index
    %c0_3 = arith.constant 0 : index
    %6 = vector.load %arg6[%c0_2, %c0_3] : memref<1x128xf32, #tpu.memory_space<vmem>>, vector<1x128xf32>
    %7 = vector.shape_cast %6 : vector<1x128xf32> to vector<1x128xf32>
    %8 = vector.broadcast %7 : vector<1x128xf32> to vector<2x128xf32>
    %c0_4 = arith.constant 0 : index
    %c0_5 = arith.constant 0 : index
    %9 = vector.load %arg8[%c0_4, %c0_5] : memref<2x128xf32, #tpu.memory_space<vmem>>, vector<2x128xf32>
    %c0_i32_6 = arith.constant 0 : i32
    %c0_7 = arith.constant 0 : index
    %c0_8 = arith.constant 0 : index
    %10 = vector.load %arg4[%c0_7, %c0_8] : memref<128x128xf32, #tpu.memory_space<vmem>>, vector<128x128xf32>
    %cst = arith.constant dense<0.000000e+00> : vector<2x128xf32>
    %11 = tpu.matmul %9, %10, %cst {dimension_numbers = #tpu.dot_dimension_numbers<[1], [0], [0], [1], [0, 0, 1, 1], [], []>} : vector<2x128xf32>, vector<128x128xf32>, vector<2x128xf32> -> vector<2x128xf32>
    %12 = arith.index_cast %c0_i32_6 : i32 to index
    %c0_9 = arith.constant 0 : index
    %c0_10 = arith.constant 0 : index
    %13 = vector.load %arg2[%12, %c0_9, %c0_10] : memref<8x2x128xf32, #tpu.memory_space<vmem>>, vector<1x2x128xf32>
    %14 = vector.shape_cast %13 : vector<1x2x128xf32> to vector<2x128xf32>
    %15 = arith.addf %11, %14 : vector<2x128xf32>
    %16 = arith.mulf %5, %9 : vector<2x128xf32>
    %cst_11 = arith.constant 0.000000e+00 : f32
    %17 = vector.broadcast %cst_11 : f32 to vector<2x128xf32>
    %18 = arith.maximumf %15, %17 : vector<2x128xf32>
    %19 = arith.mulf %8, %18 : vector<2x128xf32>
    %20 = arith.addf %16, %19 : vector<2x128xf32>
    %21 = arith.index_cast %c0_i32_6 : i32 to index
    %c0_12 = arith.constant 0 : index
    %c0_13 = arith.constant 0 : index
    %22 = vector.load %arg7[%21, %c0_12, %c0_13] : memref<8x2x128xf32, #tpu.memory_space<vmem>>, vector<1x2x128xf32>
    %23 = vector.shape_cast %22 : vector<1x2x128xf32> to vector<2x128xf32>
    %24 = vector.shape_cast %20 : vector<2x128xf32> to vector<1x2x128xf32>
    tpu.vector_store %arg7[%21, %c0_12, %c0_13], %24 {strides = array<i32>} : memref<8x2x128xf32, #tpu.memory_space<vmem>>, vector<1x2x128xf32>,
    %c1_i32 = arith.constant 1 : i32
    %c0_14 = arith.constant 0 : index
    %c0_15 = arith.constant 0 : index
    %25 = vector.load %arg4[%c0_14, %c0_15] : memref<128x128xf32, #tpu.memory_space<vmem>>, vector<128x128xf32>
    %cst_16 = arith.constant dense<0.000000e+00> : vector<2x128xf32>
    %26 = tpu.matmul %20, %25, %cst_16 {dimension_numbers = #tpu.dot_dimension_numbers<[1], [0], [0], [1], [0, 0, 1, 1], [], []>} : vector<2x128xf32>, vector<128x128xf32>, vector<2x128xf32> -> vector<2x128xf32>
    %27 = arith.index_cast %c1_i32 : i32 to index
    %c0_17 = arith.constant 0 : index
    %c0_18 = arith.constant 0 : index
    %28 = vector.load %arg2[%27, %c0_17, %c0_18] : memref<8x2x128xf32, #tpu.memory_space<vmem>>, vector<1x2x128xf32>
    %29 = vector.shape_cast %28 : vector<1x2x128xf32> to vector<2x128xf32>
    %30 = arith.addf %26, %29 : vector<2x128xf32>
    %31 = arith.mulf %5, %20 : vector<2x128xf32>
    %cst_19 = arith.constant 0.000000e+00 : f32
    %32 = vector.broadcast %cst_19 : f32 to vector<2x128xf32>
    %33 = arith.maximumf %30, %32 : vector<2x128xf32>
    %34 = arith.mulf %8, %33 : vector<2x128xf32>
    %35 = arith.addf %31, %34 : vector<2x128xf32>
    %36 = arith.index_cast %c1_i32 : i32 to index
    %c0_20 = arith.constant 0 : index
    %c0_21 = arith.constant 0 : index
    %37 = vector.load %arg7[%36, %c0_20, %c0_21] : memref<8x2x128xf32, #tpu.memory_space<vmem>>, vector<1x2x128xf32>
    %38 = vector.shape_cast %37 : vector<1x2x128xf32> to vector<2x128xf32>
    %39 = vector.shape_cast %35 : vector<2x128xf32> to vector<1x2x128xf32>
    tpu.vector_store %arg7[%36, %c0_20, %c0_21], %39 {strides = array<i32>} : memref<8x2x128xf32, #tpu.memory_space<vmem>>, vector<1x2x128xf32>,
    %c2_i32 = arith.constant 2 : i32
    %c0_22 = arith.constant 0 : index
    %c0_23 = arith.constant 0 : index
    %40 = vector.load %arg4[%c0_22, %c0_23] : memref<128x128xf32, #tpu.memory_space<vmem>>, vector<128x128xf32>
    %cst_24 = arith.constant dense<0.000000e+00> : vector<2x128xf32>
    %41 = tpu.matmul %35, %40, %cst_24 {dimension_numbers = #tpu.dot_dimension_numbers<[1], [0], [0], [1], [0, 0, 1, 1], [], []>} : vector<2x128xf32>, vector<128x128xf32>, vector<2x128xf32> -> vector<2x128xf32>
    %42 = arith.index_cast %c2_i32 : i32 to index
    %c0_25 = arith.constant 0 : index
    %c0_26 = arith.constant 0 : index
    %43 = vector.load %arg2[%42, %c0_25, %c0_26] : memref<8x2x128xf32, #tpu.memory_space<vmem>>, vector<1x2x128xf32>
    %44 = vector.shape_cast %43 : vector<1x2x128xf32> to vector<2x128xf32>
    %45 = arith.addf %41, %44 : vector<2x128xf32>
    %46 = arith.mulf %5, %35 : vector<2x128xf32>
    %cst_27 = arith.constant 0.000000e+00 : f32
    %47 = vector.broadcast %cst_27 : f32 to vector<2x128xf32>
    %48 = arith.maximumf %45, %47 : vector<2x128xf32>
    %49 = arith.mulf %8, %48 : vector<2x128xf32>
    %50 = arith.addf %46, %49 : vector<2x128xf32>
    %51 = arith.index_cast %c2_i32 : i32 to index
    %c0_28 = arith.constant 0 : index
    %c0_29 = arith.constant 0 : index
    %52 = vector.load %arg7[%51, %c0_28, %c0_29] : memref<8x2x128xf32, #tpu.memory_space<vmem>>, vector<1x2x128xf32>
    %53 = vector.shape_cast %52 : vector<1x2x128xf32> to vector<2x128xf32>
    %54 = vector.shape_cast %50 : vector<2x128xf32> to vector<1x2x128xf32>
    tpu.vector_store %arg7[%51, %c0_28, %c0_29], %54 {strides = array<i32>} : memref<8x2x128xf32, #tpu.memory_space<vmem>>, vector<1x2x128xf32>,
    %c3_i32 = arith.constant 3 : i32
    %c0_30 = arith.constant 0 : index
    %c0_31 = arith.constant 0 : index
    %55 = vector.load %arg4[%c0_30, %c0_31] : memref<128x128xf32, #tpu.memory_space<vmem>>, vector<128x128xf32>
    %cst_32 = arith.constant dense<0.000000e+00> : vector<2x128xf32>
    %56 = tpu.matmul %50, %55, %cst_32 {dimension_numbers = #tpu.dot_dimension_numbers<[1], [0], [0], [1], [0, 0, 1, 1], [], []>} : vector<2x128xf32>, vector<128x128xf32>, vector<2x128xf32> -> vector<2x128xf32>
    %57 = arith.index_cast %c3_i32 : i32 to index
    %c0_33 = arith.constant 0 : index
    %c0_34 = arith.constant 0 : index
    %58 = vector.load %arg2[%57, %c0_33, %c0_34] : memref<8x2x128xf32, #tpu.memory_space<vmem>>, vector<1x2x128xf32>
    %59 = vector.shape_cast %58 : vector<1x2x128xf32> to vector<2x128xf32>
    %60 = arith.addf %56, %59 : vector<2x128xf32>
    %61 = arith.mulf %5, %50 : vector<2x128xf32>
    %cst_35 = arith.constant 0.000000e+00 : f32
    %62 = vector.broadcast %cst_35 : f32 to vector<2x128xf32>
    %63 = arith.maximumf %60, %62 : vector<2x128xf32>
    %64 = arith.mulf %8, %63 : vector<2x128xf32>
    %65 = arith.addf %61, %64 : vector<2x128xf32>
    %66 = arith.index_cast %c3_i32 : i32 to index
    %c0_36 = arith.constant 0 : index
    %c0_37 = arith.constant 0 : index
    %67 = vector.load %arg7[%66, %c0_36, %c0_37] : memref<8x2x128xf32, #tpu.memory_space<vmem>>, vector<1x2x128xf32>
    %68 = vector.shape_cast %67 : vector<1x2x128xf32> to vector<2x128xf32>
    %69 = vector.shape_cast %65 : vector<2x128xf32> to vector<1x2x128xf32>
    tpu.vector_store %arg7[%66, %c0_36, %c0_37], %69 {strides = array<i32>} : memref<8x2x128xf32, #tpu.memory_space<vmem>>, vector<1x2x128xf32>,
    %c4_i32 = arith.constant 4 : i32
    %c0_38 = arith.constant 0 : index
    %c0_39 = arith.constant 0 : index
    %70 = vector.load %arg4[%c0_38, %c0_39] : memref<128x128xf32, #tpu.memory_space<vmem>>, vector<128x128xf32>
    %cst_40 = arith.constant dense<0.000000e+00> : vector<2x128xf32>
    %71 = tpu.matmul %65, %70, %cst_40 {dimension_numbers = #tpu.dot_dimension_numbers<[1], [0], [0], [1], [0, 0, 1, 1], [], []>} : vector<2x128xf32>, vector<128x128xf32>, vector<2x128xf32> -> vector<2x128xf32>
    %72 = arith.index_cast %c4_i32 : i32 to index
    %c0_41 = arith.constant 0 : index
    %c0_42 = arith.constant 0 : index
    %73 = vector.load %arg2[%72, %c0_41, %c0_42] : memref<8x2x128xf32, #tpu.memory_space<vmem>>, vector<1x2x128xf32>
    %74 = vector.shape_cast %73 : vector<1x2x128xf32> to vector<2x128xf32>
    %75 = arith.addf %71, %74 : vector<2x128xf32>
    %76 = arith.mulf %5, %65 : vector<2x128xf32>
    %cst_43 = arith.constant 0.000000e+00 : f32
    %77 = vector.broadcast %cst_43 : f32 to vector<2x128xf32>
    %78 = arith.maximumf %75, %77 : vector<2x128xf32>
    %79 = arith.mulf %8, %78 : vector<2x128xf32>
    %80 = arith.addf %76, %79 : vector<2x128xf32>
    %81 = arith.index_cast %c4_i32 : i32 to index
    %c0_44 = arith.constant 0 : index
    %c0_45 = arith.constant 0 : index
    %82 = vector.load %arg7[%81, %c0_44, %c0_45] : memref<8x2x128xf32, #tpu.memory_space<vmem>>, vector<1x2x128xf32>
    %83 = vector.shape_cast %82 : vector<1x2x128xf32> to vector<2x128xf32>
    %84 = vector.shape_cast %80 : vector<2x128xf32> to vector<1x2x128xf32>
    tpu.vector_store %arg7[%81, %c0_44, %c0_45], %84 {strides = array<i32>} : memref<8x2x128xf32, #tpu.memory_space<vmem>>, vector<1x2x128xf32>,
    %c5_i32 = arith.constant 5 : i32
    %c0_46 = arith.constant 0 : index
    %c0_47 = arith.constant 0 : index
    %85 = vector.load %arg4[%c0_46, %c0_47] : memref<128x128xf32, #tpu.memory_space<vmem>>, vector<128x128xf32>
    %cst_48 = arith.constant dense<0.000000e+00> : vector<2x128xf32>
    %86 = tpu.matmul %80, %85, %cst_48 {dimension_numbers = #tpu.dot_dimension_numbers<[1], [0], [0], [1], [0, 0, 1, 1], [], []>} : vector<2x128xf32>, vector<128x128xf32>, vector<2x128xf32> -> vector<2x128xf32>
    %87 = arith.index_cast %c5_i32 : i32 to index
    %c0_49 = arith.constant 0 : index
    %c0_50 = arith.constant 0 : index
    %88 = vector.load %arg2[%87, %c0_49, %c0_50] : memref<8x2x128xf32, #tpu.memory_space<vmem>>, vector<1x2x128xf32>
    %89 = vector.shape_cast %88 : vector<1x2x128xf32> to vector<2x128xf32>
    %90 = arith.addf %86, %89 : vector<2x128xf32>
    %91 = arith.mulf %5, %80 : vector<2x128xf32>
    %cst_51 = arith.constant 0.000000e+00 : f32
    %92 = vector.broadcast %cst_51 : f32 to vector<2x128xf32>
    %93 = arith.maximumf %90, %92 : vector<2x128xf32>
    %94 = arith.mulf %8, %93 : vector<2x128xf32>
    %95 = arith.addf %91, %94 : vector<2x128xf32>
    %96 = arith.index_cast %c5_i32 : i32 to index
    %c0_52 = arith.constant 0 : index
    %c0_53 = arith.constant 0 : index
    %97 = vector.load %arg7[%96, %c0_52, %c0_53] : memref<8x2x128xf32, #tpu.memory_space<vmem>>, vector<1x2x128xf32>
    %98 = vector.shape_cast %97 : vector<1x2x128xf32> to vector<2x128xf32>
    %99 = vector.shape_cast %95 : vector<2x128xf32> to vector<1x2x128xf32>
    tpu.vector_store %arg7[%96, %c0_52, %c0_53], %99 {strides = array<i32>} : memref<8x2x128xf32, #tpu.memory_space<vmem>>, vector<1x2x128xf32>,
    %c6_i32 = arith.constant 6 : i32
    %c0_54 = arith.constant 0 : index
    %c0_55 = arith.constant 0 : index
    %100 = vector.load %arg4[%c0_54, %c0_55] : memref<128x128xf32, #tpu.memory_space<vmem>>, vector<128x128xf32>
    %cst_56 = arith.constant dense<0.000000e+00> : vector<2x128xf32>
    %101 = tpu.matmul %95, %100, %cst_56 {dimension_numbers = #tpu.dot_dimension_numbers<[1], [0], [0], [1], [0, 0, 1, 1], [], []>} : vector<2x128xf32>, vector<128x128xf32>, vector<2x128xf32> -> vector<2x128xf32>
    %102 = arith.index_cast %c6_i32 : i32 to index
    %c0_57 = arith.constant 0 : index
    %c0_58 = arith.constant 0 : index
    %103 = vector.load %arg2[%102, %c0_57, %c0_58] : memref<8x2x128xf32, #tpu.memory_space<vmem>>, vector<1x2x128xf32>
    %104 = vector.shape_cast %103 : vector<1x2x128xf32> to vector<2x128xf32>
    %105 = arith.addf %101, %104 : vector<2x128xf32>
    %106 = arith.mulf %5, %95 : vector<2x128xf32>
    %cst_59 = arith.constant 0.000000e+00 : f32
    %107 = vector.broadcast %cst_59 : f32 to vector<2x128xf32>
    %108 = arith.maximumf %105, %107 : vector<2x128xf32>
    %109 = arith.mulf %8, %108 : vector<2x128xf32>
    %110 = arith.addf %106, %109 : vector<2x128xf32>
    %111 = arith.index_cast %c6_i32 : i32 to index
    %c0_60 = arith.constant 0 : index
    %c0_61 = arith.constant 0 : index
    %112 = vector.load %arg7[%111, %c0_60, %c0_61] : memref<8x2x128xf32, #tpu.memory_space<vmem>>, vector<1x2x128xf32>
    %113 = vector.shape_cast %112 : vector<1x2x128xf32> to vector<2x128xf32>
    %114 = vector.shape_cast %110 : vector<2x128xf32> to vector<1x2x128xf32>
    tpu.vector_store %arg7[%111, %c0_60, %c0_61], %114 {strides = array<i32>} : memref<8x2x128xf32, #tpu.memory_space<vmem>>, vector<1x2x128xf32>,
    %c7_i32 = arith.constant 7 : i32
    %c0_62 = arith.constant 0 : index
    %c0_63 = arith.constant 0 : index
    %115 = vector.load %arg4[%c0_62, %c0_63] : memref<128x128xf32, #tpu.memory_space<vmem>>, vector<128x128xf32>
    %cst_64 = arith.constant dense<0.000000e+00> : vector<2x128xf32>
    %116 = tpu.matmul %110, %115, %cst_64 {dimension_numbers = #tpu.dot_dimension_numbers<[1], [0], [0], [1], [0, 0, 1, 1], [], []>} : vector<2x128xf32>, vector<128x128xf32>, vector<2x128xf32> -> vector<2x128xf32>
    %117 = arith.index_cast %c7_i32 : i32 to index
    %c0_65 = arith.constant 0 : index
    %c0_66 = arith.constant 0 : index
    %118 = vector.load %arg2[%117, %c0_65, %c0_66] : memref<8x2x128xf32, #tpu.memory_space<vmem>>, vector<1x2x128xf32>
    %119 = vector.shape_cast %118 : vector<1x2x128xf32> to vector<2x128xf32>
    %120 = arith.addf %116, %119 : vector<2x128xf32>
    %121 = arith.mulf %5, %110 : vector<2x128xf32>
    %cst_67 = arith.constant 0.000000e+00 : f32
    %122 = vector.broadcast %cst_67 : f32 to vector<2x128xf32>
    %123 = arith.maximumf %120, %122 : vector<2x128xf32>
    %124 = arith.mulf %8, %123 : vector<2x128xf32>
    %125 = arith.addf %121, %124 : vector<2x128xf32>
    %126 = arith.index_cast %c7_i32 : i32 to index
    %c0_68 = arith.constant 0 : index
    %c0_69 = arith.constant 0 : index
    %127 = vector.load %arg7[%126, %c0_68, %c0_69] : memref<8x2x128xf32, #tpu.memory_space<vmem>>, vector<1x2x128xf32>
    %128 = vector.shape_cast %127 : vector<1x2x128xf32> to vector<2x128xf32>
    %129 = vector.shape_cast %125 : vector<2x128xf32> to vector<1x2x128xf32>
    tpu.vector_store %arg7[%126, %c0_68, %c0_69], %129 {strides = array<i32>} : memref<8x2x128xf32, #tpu.memory_space<vmem>>, vector<1x2x128xf32>,
    %c8_i32 = arith.constant 8 : i32
    %c0_70 = arith.constant 0 : index
    %c0_71 = arith.constant 0 : index
    %130 = vector.load %arg8[%c0_70, %c0_71] : memref<2x128xf32, #tpu.memory_space<vmem>>, vector<2x128xf32>
    tpu.vector_store %arg8[%c0_70, %c0_71], %125 {strides = array<i32>} : memref<2x128xf32, #tpu.memory_space<vmem>>, vector<2x128xf32>,
    return
  }
  func.func @transform_0(%arg0: i32, %arg1: i32) -> (i32, i32, i32) {
    %c0_i32 = arith.constant 0 : i32
    %c0_i32_0 = arith.constant 0 : i32
    return %arg1, %arg0, %c0_i32 : i32, i32, i32
  }
  func.func @transform_1(%arg0: i32, %arg1: i32) -> (i32, i32) {
    %c0_i32 = arith.constant 0 : i32
    %c0_i32_0 = arith.constant 0 : i32
    return %arg0, %c0_i32 : i32, i32
  }
  func.func @transform_2(%arg0: i32, %arg1: i32) -> (i32, i32) {
    %c0_i32 = arith.constant 0 : i32
    %c0_i32_0 = arith.constant 0 : i32
    %c0_i32_1 = arith.constant 0 : i32
    return %c0_i32, %c0_i32_0 : i32, i32
  }
  func.func @transform_3(%arg0: i32, %arg1: i32) -> (i32, i32) {
    %c0_i32 = arith.constant 0 : i32
    %c0_i32_0 = arith.constant 0 : i32
    %c0_i32_1 = arith.constant 0 : i32
    return %c0_i32, %c0_i32_0 : i32, i32
  }
  func.func @transform_4(%arg0: i32, %arg1: i32) -> (i32, i32) {
    %c0_i32 = arith.constant 0 : i32
    %c0_i32_0 = arith.constant 0 : i32
    %c0_i32_1 = arith.constant 0 : i32
    return %c0_i32, %c0_i32_0 : i32, i32
  }
  func.func @transform_5(%arg0: i32, %arg1: i32) -> (i32, i32, i32) {
    %c0_i32 = arith.constant 0 : i32
    %c0_i32_0 = arith.constant 0 : i32
    return %arg1, %arg0, %c0_i32 : i32, i32, i32
  }
}

</mosaic_0001>

<llo_original>
// kernel: tpu_custom_call.1
$region0: #{tpu_custom_call.1}
  #allocation0 [shape = 'u32[]', space=smem, size = 0x4, offset = 0x4, fixed_abs, tag = 'smem constant byte address 0x4 - core index']
  #allocation1 [shape = 'u32[144,128]{1,0:T(1,128)}', space=vmem, size = 0x12000, scoped, tag = 'internal scratch']
  #allocation2 [shape = 'f32[2,128]{1,0:T(2,128)}', space=vmem, size = 0x400, scoped, tag = 'scratch operand']
  %s0 = inlined_call_operand.hbm [shape: f32[8,2,128], index: 0, kind: input, shape index: {}]
  %s1 = inlined_call_operand.vmem [shape: f32[2,128], index: 1, kind: input, shape index: {}]
  %s2 = inlined_call_operand.hbm [shape: f32[128,128], index: 2, kind: input, shape index: {}]
  %s3 = inlined_call_operand.vmem [shape: f32[1,128], index: 3, kind: input, shape index: {}]
  %s4 = inlined_call_operand.vmem [shape: f32[1,128], index: 4, kind: input, shape index: {}]
  %s5 = inlined_call_operand.hbm [shape: f32[8,2,128], index: 5, kind: output, shape index: {}]
  %s6 = sld [smem:[#allocation0]]
  $region42: #{tpu_custom_call.1} parent=0
    _
  %s8 = ssub.s32 1, %s6
  %s9 = scalar_select 0, %s8, %s6
  $region1: #{tpu_custom_call.1} parent=0
    #allocation3 [shape = 'u8[8192]{0}', space=vmem, size = 0x2000, scoped, tag = 'input window, operand 0, single buffered']
    #allocation4 [shape = 's32[1]{0}', space=sflag, size = 0x4, scoped, tag = 'scoped memory for tpu_custom_call.1']
    #allocation5 [shape = 's32[1]{0}', space=sflag, size = 0x4, scoped, tag = 'scoped memory for tpu_custom_call.1']
    #allocation6 [shape = 'u8[65536]{0}', space=vmem, size = 0x10000, scoped, tag = 'input window, operand 2, single buffered']
    #allocation7 [shape = 's32[1]{0}', space=sflag, size = 0x4, scoped, tag = 'scoped memory for tpu_custom_call.1']
    #allocation8 [shape = 'u8[8192]{0}', space=vmem, size = 0x2000, scoped, tag = 'output window, operand 0, single buffered']
    %10 = vsyncpa [#allocation4], 0
    %11 = vsyncpa [#allocation7], 0
    %12 = vsyncpa [#allocation5], 0
    // Predicated region
    $region2: #{tpu_custom_call.1} parent=1 // pred_check
      _
    $region3: #{tpu_custom_call.1} parent=1 // pred_check_branch
      %14 = sbr.rel (0) target = $region5
    $region4: #{tpu_custom_call.1} parent=1 // pred_region
      %s16 = ssub.s32 256, 256
      %17 = vsyncadd [#allocation4], %s16
      %s18 = sshll.u32 [#allocation3], 4
      %s19 = int_to_ptr.vmem [resolvable:$true] %s18
      %24 = dma.hbm_to_vmem [thread:$0]  %s0, 256, %s19, [#allocation4], 32, 32, 2
    $region5: #{tpu_custom_call.1} parent=1 // pred_fallthru
      _
    // Predicated region
    $region6: #{tpu_custom_call.1} parent=1 // pred_check
      _
    $region7: #{tpu_custom_call.1} parent=1 // pred_check_branch
      %26 = sbr.rel (0) target = $region9
    $region8: #{tpu_custom_call.1} parent=1 // pred_region
      _
    $region9: #{tpu_custom_call.1} parent=1 // pred_fallthru
      _
    // Predicated region
    $region10: #{tpu_custom_call.1} parent=1 // pred_check
      _
    $region11: #{tpu_custom_call.1} parent=1 // pred_check_branch
      %28 = sbr.rel (0) target = $region13
    $region12: #{tpu_custom_call.1} parent=1 // pred_region
      %s30 = ssub.s32 2048, 2048
      %31 = vsyncadd [#allocation7], %s30
      %s32 = sshll.u32 [#allocation6], 4
      %s33 = int_to_ptr.vmem [resolvable:$true] %s32
      %38 = dma.hbm_to_vmem [thread:$0]  %s2, 2048, %s33, [#allocation7], 128, 128, 8
    $region13: #{tpu_custom_call.1} parent=1 // pred_fallthru
      _
    // Predicated region
    $region14: #{tpu_custom_call.1} parent=1 // pred_check
      _
    $region15: #{tpu_custom_call.1} parent=1 // pred_check_branch
      %40 = sbr.rel (0) target = $region17
    $region16: #{tpu_custom_call.1} parent=1 // pred_region
      _
    $region17: #{tpu_custom_call.1} parent=1 // pred_fallthru
      _
    // Predicated region
    $region18: #{tpu_custom_call.1} parent=1 // pred_check
      _
    $region19: #{tpu_custom_call.1} parent=1 // pred_check_branch
      %42 = sbr.rel (0) target = $region21
    $region20: #{tpu_custom_call.1} parent=1 // pred_region
      _
    $region21: #{tpu_custom_call.1} parent=1 // pred_fallthru
      _
    // Predicated region
    $region22: #{tpu_custom_call.1} parent=1 // pred_check
      _
    $region23: #{tpu_custom_call.1} parent=1 // pred_check_branch
      %44 = sbr.rel (0) target = $region25
    $region24: #{tpu_custom_call.1} parent=1 // pred_region
      %45 = dma.done [#allocation4], 256
    $region25: #{tpu_custom_call.1} parent=1 // pred_fallthru
      _
    // Predicated region
    $region26: #{tpu_custom_call.1} parent=1 // pred_check
      _
    $region27: #{tpu_custom_call.1} parent=1 // pred_check_branch
      %47 = sbr.rel (0) target = $region29
    $region28: #{tpu_custom_call.1} parent=1 // pred_region
      %48 = dma.done [#allocation7], 2048
    $region29: #{tpu_custom_call.1} parent=1 // pred_fallthru
      _
    %p49 = scmp.eq.s32.totalorder 0, 0
    // Predicated region
    $region30: #{tpu_custom_call.1} parent=1 // pred_check
      %p50 = pneg %p49
    $region31: #{tpu_custom_call.1} parent=1 // pred_check_branch
      %52 = sbr.rel (%p50) target = $region33
    $region32: #{tpu_custom_call.1} parent=1 // pred_region
      %v53 = vld [vmem:[%s1] sm:$0x3]
      %54 = vst [vmem:[#allocation2] sm:$0x3] %v53
    $region33: #{tpu_custom_call.1} parent=1 // pred_fallthru
      _
    %v55 = vld [vmem:[%s3] sm:$0x1]
    %v57 = vlaneseq
    %v58 = vshrl.u32 %v57, 7
    %v59 = vsub.s32 0, %v58
    %v60 = vrot.slane %v55, %v59
    %v62 = vld [vmem:[%s4] sm:$0x1]
    %v64 = vlaneseq
    %v65 = vshrl.u32 %v64, 7
    %v66 = vsub.s32 0, %v65
    %v67 = vrot.slane %v62, %v66
    %v69 = vld [vmem:[#allocation2] sm:$0x3]
    %v70 = vld [vmem:[#allocation6] sm:$0xff]
    %v71 = vld [vmem:[#allocation6 + $0x8] sm:$0xff]
    %v72 = vld [vmem:[#allocation6 + $0x10] sm:$0xff]
    %v73 = vld [vmem:[#allocation6 + $0x18] sm:$0xff]
    %v74 = vld [vmem:[#allocation6 + $0x20] sm:$0xff]
    %v75 = vld [vmem:[#allocation6 + $0x28] sm:$0xff]
    %v76 = vld [vmem:[#allocation6 + $0x30] sm:$0xff]
    %v77 = vld [vmem:[#allocation6 + $0x38] sm:$0xff]
    %v78 = vld [vmem:[#allocation6 + $0x40] sm:$0xff]
    %v79 = vld [vmem:[#allocation6 + $0x48] sm:$0xff]
    %v80 = vld [vmem:[#allocation6 + $0x50] sm:$0xff]
    %v81 = vld [vmem:[#allocation6 + $0x58] sm:$0xff]
    %v82 = vld [vmem:[#allocation6 + $0x60] sm:$0xff]
    %v83 = vld [vmem:[#allocation6 + $0x68] sm:$0xff]
    %v84 = vld [vmem:[#allocation6 + $0x70] sm:$0xff]
    %v85 = vld [vmem:[#allocation6 + $0x78] sm:$0xff]
    %v86 = vld [vmem:[#allocation3] sm:$0x3]
    %87 = vmatprep.subr.mxu0 0.0
    %88 = vmatpush1.msra.mxu0 %v70
    %89 = vmatprep.subr.mxu0 0.0
    %90 = vmatpush1.msra.mxu0 %v71
    %91 = vmatprep.subr.mxu0 0.0
    %92 = vmatpush1.msra.mxu0 %v72
    %93 = vmatprep.subr.mxu0 0.0
    %94 = vmatpush1.msra.mxu0 %v73
    %95 = vmatprep.subr.mxu0 0.0
    %96 = vmatpush1.msra.mxu0 %v74
    %97 = vmatprep.subr.mxu0 0.0
    %98 = vmatpush1.msra.mxu0 %v75
    %99 = vmatprep.subr.mxu0 0.0
    %100 = vmatpush1.msra.mxu0 %v76
    %101 = vmatprep.subr.mxu0 0.0
    %102 = vmatpush1.msra.mxu0 %v77
    %103 = vmatprep.subr.mxu0 0.0
    %104 = vmatpush1.msra.mxu0 %v78
    %105 = vmatprep.subr.mxu0 0.0
    %106 = vmatpush1.msra.mxu0 %v79
    %107 = vmatprep.subr.mxu0 0.0
    %108 = vmatpush1.msra.mxu0 %v80
    %109 = vmatprep.subr.mxu0 0.0
    %110 = vmatpush1.msra.mxu0 %v81
    %111 = vmatprep.subr.mxu0 0.0
    %112 = vmatpush1.msra.mxu0 %v82
    %113 = vmatprep.subr.mxu0 0.0
    %114 = vmatpush1.msra.mxu0 %v83
    %115 = vmatprep.subr.mxu0 0.0
    %116 = vmatpush1.msra.mxu0 %v84
    %117 = vmatprep.subr.mxu0 0.0
    %118 = vmatpush1.msra.mxu0 %v85
    %119 = vmatprep.subr.mxu0 0.0
    %120 = vmatpush1.msra.mxu0 0.0
    %121 = vmatprep.subr.mxu0 0.0
    %122 = vmatpush1.msra.mxu0 0.0
    %123 = vmatprep.subr.mxu0 0.0
    %124 = vmatpush1.msra.mxu0 0.0
    %125 = vmatprep.subr.mxu0 0.0
    %126 = vmatpush1.msra.mxu0 0.0
    %127 = vmatprep.subr.mxu0 0.0
    %128 = vmatpush1.msra.mxu0 0.0
    %129 = vmatprep.subr.mxu0 0.0
    %130 = vmatpush1.msra.mxu0 0.0
    %131 = vmatprep.subr.mxu0 0.0
    %132 = vmatpush1.msra.mxu0 0.0
    %133 = vmatprep.subr.mxu0 0.0
    %134 = vmatpush1.msra.mxu0 0.0
    %135 = vmatprep.subr.mxu0 0.0
    %136 = vmatpush1.msra.mxu0 0.0
    %137 = vmatprep.subr.mxu0 0.0
    %138 = vmatpush1.msra.mxu0 0.0
    %139 = vmatprep.subr.mxu0 0.0
    %140 = vmatpush1.msra.mxu0 0.0
    %141 = vmatprep.subr.mxu0 0.0
    %142 = vmatpush1.msra.mxu0 0.0
    %143 = vmatprep.subr.mxu0 0.0
    %144 = vmatpush1.msra.mxu0 0.0
    %145 = vmatprep.subr.mxu0 0.0
    %146 = vmatpush1.msra.mxu0 0.0
    %147 = vmatprep.subr.mxu0 0.0
    %148 = vmatpush1.msra.mxu0 0.0
    %149 = vmatprep.subr.mxu0 0.0
    %150 = vmatpush1.msra.mxu0 0.0
    %151 = vmatprep.mubr.f32.mxu0 0.0
    %152 = vmatmul.mubr.f32.gmra.mrb[0].mxu0 %v69
    %v153 = vpop.f32.mrb[0].mxu0
    %v154 = vadd.f32 %v86, %v153
    %v155 = vpop.f32.mrb[0].mxu0
    %156 = vdwg.mxu0
    %v157 = vmul.f32 %v60, %v69
    %v158 = vmax.f32 %v154, 0.0
    %v159 = vmul.f32 %v67, %v158
    %v160 = vadd.f32 %v157, %v159
    %161 = vst [vmem:[#allocation8] sm:$0x3] %v160
    %v162 = vld [vmem:[#allocation6] sm:$0xff]
    %v163 = vld [vmem:[#allocation6 + $0x8] sm:$0xff]
    %v164 = vld [vmem:[#allocation6 + $0x10] sm:$0xff]
    %v165 = vld [vmem:[#allocation6 + $0x18] sm:$0xff]
    %v166 = vld [vmem:[#allocation6 + $0x20] sm:$0xff]
    %v167 = vld [vmem:[#allocation6 + $0x28] sm:$0xff]
    %v168 = vld [vmem:[#allocation6 + $0x30] sm:$0xff]
    %v169 = vld [vmem:[#allocation6 + $0x38] sm:$0xff]
    %v170 = vld [vmem:[#allocation6 + $0x40] sm:$0xff]
    %v171 = vld [vmem:[#allocation6 + $0x48] sm:$0xff]
    %v172 = vld [vmem:[#allocation6 + $0x50] sm:$0xff]
    %v173 = vld [vmem:[#allocation6 + $0x58] sm:$0xff]
    %v174 = vld [vmem:[#allocation6 + $0x60] sm:$0xff]
    %v175 = vld [vmem:[#allocation6 + $0x68] sm:$0xff]
    %v176 = vld [vmem:[#allocation6 + $0x70] sm:$0xff]
    %v177 = vld [vmem:[#allocation6 + $0x78] sm:$0xff]
    %s178 = scalar_lea.vmem [#allocation3], 2
    %v179 = vld [vmem:[%s178] sm:$0x3]
    %180 = vmatprep.subr.mxu0 0.0
    %181 = vmatpush1.msra.mxu0 %v162
    %182 = vmatprep.subr.mxu0 0.0
    %183 = vmatpush1.msra.mxu0 %v163
    %184 = vmatprep.subr.mxu0 0.0
    %185 = vmatpush1.msra.mxu0 %v164
    %186 = vmatprep.subr.mxu0 0.0
    %187 = vmatpush1.msra.mxu0 %v165
    %188 = vmatprep.subr.mxu0 0.0
    %189 = vmatpush1.msra.mxu0 %v166
    %190 = vmatprep.subr.mxu0 0.0
    %191 = vmatpush1.msra.mxu0 %v167
    %192 = vmatprep.subr.mxu0 0.0
    %193 = vmatpush1.msra.mxu0 %v168
    %194 = vmatprep.subr.mxu0 0.0
    %195 = vmatpush1.msra.mxu0 %v169
    %196 = vmatprep.subr.mxu0 0.0
    %197 = vmatpush1.msra.mxu0 %v170
    %198 = vmatprep.subr.mxu0 0.0
    %199 = vmatpush1.msra.mxu0 %v171
    %200 = vmatprep.subr.mxu0 0.0
    %201 = vmatpush1.msra.mxu0 %v172
    %202 = vmatprep.subr.mxu0 0.0
    %203 = vmatpush1.msra.mxu0 %v173
    %204 = vmatprep.subr.mxu0 0.0
    %205 = vmatpush1.msra.mxu0 %v174
    %206 = vmatprep.subr.mxu0 0.0
    %207 = vmatpush1.msra.mxu0 %v175
    %208 = vmatprep.subr.mxu0 0.0
    %209 = vmatpush1.msra.mxu0 %v176
    %210 = vmatprep.subr.mxu0 0.0
    %211 = vmatpush1.msra.mxu0 %v177
    %212 = vmatprep.subr.mxu0 0.0
    %213 = vmatpush1.msra.mxu0 0.0
    %214 = vmatprep.subr.mxu0 0.0
    %215 = vmatpush1.msra.mxu0 0.0
    %216 = vmatprep.subr.mxu0 0.0
    %217 = vmatpush1.msra.mxu0 0.0
    %218 = vmatprep.subr.mxu0 0.0
    %219 = vmatpush1.msra.mxu0 0.0
    %220 = vmatprep.subr.mxu0 0.0
    %221 = vmatpush1.msra.mxu0 0.0
    %222 = vmatprep.subr.mxu0 0.0
    %223 = vmatpush1.msra.mxu0 0.0
    %224 = vmatprep.subr.mxu0 0.0
    %225 = vmatpush1.msra.mxu0 0.0
    %226 = vmatprep.subr.mxu0 0.0
    %227 = vmatpush1.msra.mxu0 0.0
    %228 = vmatprep.subr.mxu0 0.0
    %229 = vmatpush1.msra.mxu0 0.0
    %230 = vmatprep.subr.mxu0 0.0
    %231 = vmatpush1.msra.mxu0 0.0
    %232 = vmatprep.subr.mxu0 0.0
    %233 = vmatpush1.msra.mxu0 0.0
    %234 = vmatprep.subr.mxu0 0.0
    %235 = vmatpush1.msra.mxu0 0.0
    %236 = vmatprep.subr.mxu0 0.0
    %237 = vmatpush1.msra.mxu0 0.0
    %238 = vmatprep.subr.mxu0 0.0
    %239 = vmatpush1.msra.mxu0 0.0
    %240 = vmatprep.subr.mxu0 0.0
    %241 = vmatpush1.msra.mxu0 0.0
    %242 = vmatprep.subr.mxu0 0.0
    %243 = vmatpush1.msra.mxu0 0.0
    %244 = vmatprep.mubr.f32.mxu0 0.0
    %245 = vmatmul.mubr.f32.gmra.mrb[0].mxu0 %v160
    %v246 = vpop.f32.mrb[0].mxu0
    %v247 = vadd.f32 %v179, %v246
    %v248 = vpop.f32.mrb[0].mxu0
    %249 = vdwg.mxu0
    %v250 = vmul.f32 %v60, %v160
    %v251 = vmax.f32 %v247, 0.0
    %v252 = vmul.f32 %v67, %v251
    %v253 = vadd.f32 %v250, %v252
    %s254 = scalar_lea.vmem [#allocation8], 2
    %255 = vst [vmem:[%s254] sm:$0x3] %v253
    %v256 = vld [vmem:[#allocation6] sm:$0xff]
    %v257 = vld [vmem:[#allocation6 + $0x8] sm:$0xff]
    %v258 = vld [vmem:[#allocation6 + $0x10] sm:$0xff]
    %v259 = vld [vmem:[#allocation6 + $0x18] sm:$0xff]
    %v260 = vld [vmem:[#allocation6 + $0x20] sm:$0xff]
    %v261 = vld [vmem:[#allocation6 + $0x28] sm:$0xff]
    %v262 = vld [vmem:[#allocation6 + $0x30] sm:$0xff]
    %v263 = vld [vmem:[#allocation6 + $0x38] sm:$0xff]
    %v264 = vld [vmem:[#allocation6 + $0x40] sm:$0xff]
    %v265 = vld [vmem:[#allocation6 + $0x48] sm:$0xff]
    %v266 = vld [vmem:[#allocation6 + $0x50] sm:$0xff]
    %v267 = vld [vmem:[#allocation6 + $0x58] sm:$0xff]
    %v268 = vld [vmem:[#allocation6 + $0x60] sm:$0xff]
    %v269 = vld [vmem:[#allocation6 + $0x68] sm:$0xff]
    %v270 = vld [vmem:[#allocation6 + $0x70] sm:$0xff]
    %v271 = vld [vmem:[#allocation6 + $0x78] sm:$0xff]
    %s272 = scalar_lea.vmem [#allocation3], 4
    %v273 = vld [vmem:[%s272] sm:$0x3]
    %274 = vmatprep.subr.mxu0 0.0
    %275 = vmatpush1.msra.mxu0 %v256
    %276 = vmatprep.subr.mxu0 0.0
    %277 = vmatpush1.msra.mxu0 %v257
    %278 = vmatprep.subr.mxu0 0.0
    %279 = vmatpush1.msra.mxu0 %v258
    %280 = vmatprep.subr.mxu0 0.0
    %281 = vmatpush1.msra.mxu0 %v259
    %282 = vmatprep.subr.mxu0 0.0
    %283 = vmatpush1.msra.mxu0 %v260
    %284 = vmatprep.subr.mxu0 0.0
    %285 = vmatpush1.msra.mxu0 %v261
    %286 = vmatprep.subr.mxu0 0.0
    %287 = vmatpush1.msra.mxu0 %v262
    %288 = vmatprep.subr.mxu0 0.0
    %289 = vmatpush1.msra.mxu0 %v263
    %290 = vmatprep.subr.mxu0 0.0
    %291 = vmatpush1.msra.mxu0 %v264
    %292 = vmatprep.subr.mxu0 0.0
    %293 = vmatpush1.msra.mxu0 %v265
    %294 = vmatprep.subr.mxu0 0.0
    %295 = vmatpush1.msra.mxu0 %v266
    %296 = vmatprep.subr.mxu0 0.0
    %297 = vmatpush1.msra.mxu0 %v267
    %298 = vmatprep.subr.mxu0 0.0
    %299 = vmatpush1.msra.mxu0 %v268
    %300 = vmatprep.subr.mxu0 0.0
    %301 = vmatpush1.msra.mxu0 %v269
    %302 = vmatprep.subr.mxu0 0.0
    %303 = vmatpush1.msra.mxu0 %v270
    %304 = vmatprep.subr.mxu0 0.0
    %305 = vmatpush1.msra.mxu0 %v271
    %306 = vmatprep.subr.mxu0 0.0
    %307 = vmatpush1.msra.mxu0 0.0
    %308 = vmatprep.subr.mxu0 0.0
    %309 = vmatpush1.msra.mxu0 0.0
    %310 = vmatprep.subr.mxu0 0.0
    %311 = vmatpush1.msra.mxu0 0.0
    %312 = vmatprep.subr.mxu0 0.0
    %313 = vmatpush1.msra.mxu0 0.0
    %314 = vmatprep.subr.mxu0 0.0
    %315 = vmatpush1.msra.mxu0 0.0
    %316 = vmatprep.subr.mxu0 0.0
    %317 = vmatpush1.msra.mxu0 0.0
    %318 = vmatprep.subr.mxu0 0.0
    %319 = vmatpush1.msra.mxu0 0.0
    %320 = vmatprep.subr.mxu0 0.0
    %321 = vmatpush1.msra.mxu0 0.0
    %322 = vmatprep.subr.mxu0 0.0
    %323 = vmatpush1.msra.mxu0 0.0
    %324 = vmatprep.subr.mxu0 0.0
    %325 = vmatpush1.msra.mxu0 0.0
    %326 = vmatprep.subr.mxu0 0.0
    %327 = vmatpush1.msra.mxu0 0.0
    %328 = vmatprep.subr.mxu0 0.0
    %329 = vmatpush1.msra.mxu0 0.0
    %330 = vmatprep.subr.mxu0 0.0
    %331 = vmatpush1.msra.mxu0 0.0
    %332 = vmatprep.subr.mxu0 0.0
    %333 = vmatpush1.msra.mxu0 0.0
    %334 = vmatprep.subr.mxu0 0.0
    %335 = vmatpush1.msra.mxu0 0.0
    %336 = vmatprep.subr.mxu0 0.0
    %337 = vmatpush1.msra.mxu0 0.0
    %338 = vmatprep.mubr.f32.mxu0 0.0
    %339 = vmatmul.mubr.f32.gmra.mrb[0].mxu0 %v253
    %v340 = vpop.f32.mrb[0].mxu0
    %v341 = vadd.f32 %v273, %v340
    %v342 = vpop.f32.mrb[0].mxu0
    %343 = vdwg.mxu0
    %v344 = vmul.f32 %v60, %v253
    %v345 = vmax.f32 %v341, 0.0
    %v346 = vmul.f32 %v67, %v345
    %v347 = vadd.f32 %v344, %v346
    %s348 = scalar_lea.vmem [#allocation8], 4
    %349 = vst [vmem:[%s348] sm:$0x3] %v347
    %v350 = vld [vmem:[#allocation6] sm:$0xff]
    %v351 = vld [vmem:[#allocation6 + $0x8] sm:$0xff]
    %v352 = vld [vmem:[#allocation6 + $0x10] sm:$0xff]
    %v353 = vld [vmem:[#allocation6 + $0x18] sm:$0xff]
    %v354 = vld [vmem:[#allocation6 + $0x20] sm:$0xff]
    %v355 = vld [vmem:[#allocation6 + $0x28] sm:$0xff]
    %v356 = vld [vmem:[#allocation6 + $0x30] sm:$0xff]
    %v357 = vld [vmem:[#allocation6 + $0x38] sm:$0xff]
    %v358 = vld [vmem:[#allocation6 + $0x40] sm:$0xff]
    %v359 = vld [vmem:[#allocation6 + $0x48] sm:$0xff]
    %v360 = vld [vmem:[#allocation6 + $0x50] sm:$0xff]
    %v361 = vld [vmem:[#allocation6 + $0x58] sm:$0xff]
    %v362 = vld [vmem:[#allocation6 + $0x60] sm:$0xff]
    %v363 = vld [vmem:[#allocation6 + $0x68] sm:$0xff]
    %v364 = vld [vmem:[#allocation6 + $0x70] sm:$0xff]
    %v365 = vld [vmem:[#allocation6 + $0x78] sm:$0xff]
    %s366 = scalar_lea.vmem [#allocation3], 6
    %v367 = vld [vmem:[%s366] sm:$0x3]
    %368 = vmatprep.subr.mxu0 0.0
    %369 = vmatpush1.msra.mxu0 %v350
    %370 = vmatprep.subr.mxu0 0.0
    %371 = vmatpush1.msra.mxu0 %v351
    %372 = vmatprep.subr.mxu0 0.0
    %373 = vmatpush1.msra.mxu0 %v352
    %374 = vmatprep.subr.mxu0 0.0
    %375 = vmatpush1.msra.mxu0 %v353
    %376 = vmatprep.subr.mxu0 0.0
    %377 = vmatpush1.msra.mxu0 %v354
    %378 = vmatprep.subr.mxu0 0.0
    %379 = vmatpush1.msra.mxu0 %v355
    %380 = vmatprep.subr.mxu0 0.0
    %381 = vmatpush1.msra.mxu0 %v356
    %382 = vmatprep.subr.mxu0 0.0
    %383 = vmatpush1.msra.mxu0 %v357
    %384 = vmatprep.subr.mxu0 0.0
    %385 = vmatpush1.msra.mxu0 %v358
    %386 = vmatprep.subr.mxu0 0.0
    %387 = vmatpush1.msra.mxu0 %v359
    %388 = vmatprep.subr.mxu0 0.0
    %389 = vmatpush1.msra.mxu0 %v360
    %390 = vmatprep.subr.mxu0 0.0
    %391 = vmatpush1.msra.mxu0 %v361
    %392 = vmatprep.subr.mxu0 0.0
    %393 = vmatpush1.msra.mxu0 %v362
    %394 = vmatprep.subr.mxu0 0.0
    %395 = vmatpush1.msra.mxu0 %v363
    %396 = vmatprep.subr.mxu0 0.0
    %397 = vmatpush1.msra.mxu0 %v364
    %398 = vmatprep.subr.mxu0 0.0
    %399 = vmatpush1.msra.mxu0 %v365
    %400 = vmatprep.subr.mxu0 0.0
    %401 = vmatpush1.msra.mxu0 0.0
    %402 = vmatprep.subr.mxu0 0.0
    %403 = vmatpush1.msra.mxu0 0.0
    %404 = vmatprep.subr.mxu0 0.0
    %405 = vmatpush1.msra.mxu0 0.0
    %406 = vmatprep.subr.mxu0 0.0
    %407 = vmatpush1.msra.mxu0 0.0
    %408 = vmatprep.subr.mxu0 0.0
    %409 = vmatpush1.msra.mxu0 0.0
    %410 = vmatprep.subr.mxu0 0.0
    %411 = vmatpush1.msra.mxu0 0.0
    %412 = vmatprep.subr.mxu0 0.0
    %413 = vmatpush1.msra.mxu0 0.0
    %414 = vmatprep.subr.mxu0 0.0
    %415 = vmatpush1.msra.mxu0 0.0
    %416 = vmatprep.subr.mxu0 0.0
    %417 = vmatpush1.msra.mxu0 0.0
    %418 = vmatprep.subr.mxu0 0.0
    %419 = vmatpush1.msra.mxu0 0.0
    %420 = vmatprep.subr.mxu0 0.0
    %421 = vmatpush1.msra.mxu0 0.0
    %422 = vmatprep.subr.mxu0 0.0
    %423 = vmatpush1.msra.mxu0 0.0
    %424 = vmatprep.subr.mxu0 0.0
    %425 = vmatpush1.msra.mxu0 0.0
    %426 = vmatprep.subr.mxu0 0.0
    %427 = vmatpush1.msra.mxu0 0.0
    %428 = vmatprep.subr.mxu0 0.0
    %429 = vmatpush1.msra.mxu0 0.0
    %430 = vmatprep.subr.mxu0 0.0
    %431 = vmatpush1.msra.mxu0 0.0
    %432 = vmatprep.mubr.f32.mxu0 0.0
    %433 = vmatmul.mubr.f32.gmra.mrb[0].mxu0 %v347
    %v434 = vpop.f32.mrb[0].mxu0
    %v435 = vadd.f32 %v367, %v434
    %v436 = vpop.f32.mrb[0].mxu0
    %437 = vdwg.mxu0
    %v438 = vmul.f32 %v60, %v347
    %v439 = vmax.f32 %v435, 0.0
    %v440 = vmul.f32 %v67, %v439
    %v441 = vadd.f32 %v438, %v440
    %s442 = scalar_lea.vmem [#allocation8], 6
    %443 = vst [vmem:[%s442] sm:$0x3] %v441
    %v444 = vld [vmem:[#allocation6] sm:$0xff]
    %v445 = vld [vmem:[#allocation6 + $0x8] sm:$0xff]
    %v446 = vld [vmem:[#allocation6 + $0x10] sm:$0xff]
    %v447 = vld [vmem:[#allocation6 + $0x18] sm:$0xff]
    %v448 = vld [vmem:[#allocation6 + $0x20] sm:$0xff]
    %v449 = vld [vmem:[#allocation6 + $0x28] sm:$0xff]
    %v450 = vld [vmem:[#allocation6 + $0x30] sm:$0xff]
    %v451 = vld [vmem:[#allocation6 + $0x38] sm:$0xff]
    %v452 = vld [vmem:[#allocation6 + $0x40] sm:$0xff]
    %v453 = vld [vmem:[#allocation6 + $0x48] sm:$0xff]
    %v454 = vld [vmem:[#allocation6 + $0x50] sm:$0xff]
    %v455 = vld [vmem:[#allocation6 + $0x58] sm:$0xff]
    %v456 = vld [vmem:[#allocation6 + $0x60] sm:$0xff]
    %v457 = vld [vmem:[#allocation6 + $0x68] sm:$0xff]
    %v458 = vld [vmem:[#allocation6 + $0x70] sm:$0xff]
    %v459 = vld [vmem:[#allocation6 + $0x78] sm:$0xff]
    %s460 = scalar_lea.vmem [#allocation3], 8
    %v461 = vld [vmem:[%s460] sm:$0x3]
    %462 = vmatprep.subr.mxu0 0.0
    %463 = vmatpush1.msra.mxu0 %v444
    %464 = vmatprep.subr.mxu0 0.0
    %465 = vmatpush1.msra.mxu0 %v445
    %466 = vmatprep.subr.mxu0 0.0
    %467 = vmatpush1.msra.mxu0 %v446
    %468 = vmatprep.subr.mxu0 0.0
    %469 = vmatpush1.msra.mxu0 %v447
    %470 = vmatprep.subr.mxu0 0.0
    %471 = vmatpush1.msra.mxu0 %v448
    %472 = vmatprep.subr.mxu0 0.0
    %473 = vmatpush1.msra.mxu0 %v449
    %474 = vmatprep.subr.mxu0 0.0
    %475 = vmatpush1.msra.mxu0 %v450
    %476 = vmatprep.subr.mxu0 0.0
    %477 = vmatpush1.msra.mxu0 %v451
    %478 = vmatprep.subr.mxu0 0.0
    %479 = vmatpush1.msra.mxu0 %v452
    %480 = vmatprep.subr.mxu0 0.0
    %481 = vmatpush1.msra.mxu0 %v453
    %482 = vmatprep.subr.mxu0 0.0
    %483 = vmatpush1.msra.mxu0 %v454
    %484 = vmatprep.subr.mxu0 0.0
    %485 = vmatpush1.msra.mxu0 %v455
    %486 = vmatprep.subr.mxu0 0.0
    %487 = vmatpush1.msra.mxu0 %v456
    %488 = vmatprep.subr.mxu0 0.0
    %489 = vmatpush1.msra.mxu0 %v457
    %490 = vmatprep.subr.mxu0 0.0
    %491 = vmatpush1.msra.mxu0 %v458
    %492 = vmatprep.subr.mxu0 0.0
    %493 = vmatpush1.msra.mxu0 %v459
    %494 = vmatprep.subr.mxu0 0.0
    %495 = vmatpush1.msra.mxu0 0.0
    %496 = vmatprep.subr.mxu0 0.0
    %497 = vmatpush1.msra.mxu0 0.0
    %498 = vmatprep.subr.mxu0 0.0
    %499 = vmatpush1.msra.mxu0 0.0
    %500 = vmatprep.subr.mxu0 0.0
    %501 = vmatpush1.msra.mxu0 0.0
    %502 = vmatprep.subr.mxu0 0.0
    %503 = vmatpush1.msra.mxu0 0.0
    %504 = vmatprep.subr.mxu0 0.0
    %505 = vmatpush1.msra.mxu0 0.0
    %506 = vmatprep.subr.mxu0 0.0
    %507 = vmatpush1.msra.mxu0 0.0
    %508 = vmatprep.subr.mxu0 0.0
    %509 = vmatpush1.msra.mxu0 0.0
    %510 = vmatprep.subr.mxu0 0.0
    %511 = vmatpush1.msra.mxu0 0.0
    %512 = vmatprep.subr.mxu0 0.0
    %513 = vmatpush1.msra.mxu0 0.0
    %514 = vmatprep.subr.mxu0 0.0
    %515 = vmatpush1.msra.mxu0 0.0
    %516 = vmatprep.subr.mxu0 0.0
    %517 = vmatpush1.msra.mxu0 0.0
    %518 = vmatprep.subr.mxu0 0.0
    %519 = vmatpush1.msra.mxu0 0.0
    %520 = vmatprep.subr.mxu0 0.0
    %521 = vmatpush1.msra.mxu0 0.0
    %522 = vmatprep.subr.mxu0 0.0
    %523 = vmatpush1.msra.mxu0 0.0
    %524 = vmatprep.subr.mxu0 0.0
    %525 = vmatpush1.msra.mxu0 0.0
    %526 = vmatprep.mubr.f32.mxu0 0.0
    %527 = vmatmul.mubr.f32.gmra.mrb[0].mxu0 %v441
    %v528 = vpop.f32.mrb[0].mxu0
    %v529 = vadd.f32 %v461, %v528
    %v530 = vpop.f32.mrb[0].mxu0
    %531 = vdwg.mxu0
    %v532 = vmul.f32 %v60, %v441
    %v533 = vmax.f32 %v529, 0.0
    %v534 = vmul.f32 %v67, %v533
    %v535 = vadd.f32 %v532, %v534
    %s536 = scalar_lea.vmem [#allocation8], 8
    %537 = vst [vmem:[%s536] sm:$0x3] %v535
    %v538 = vld [vmem:[#allocation6] sm:$0xff]
    %v539 = vld [vmem:[#allocation6 + $0x8] sm:$0xff]
    %v540 = vld [vmem:[#allocation6 + $0x10] sm:$0xff]
    %v541 = vld [vmem:[#allocation6 + $0x18] sm:$0xff]
    %v542 = vld [vmem:[#allocation6 + $0x20] sm:$0xff]
    %v543 = vld [vmem:[#allocation6 + $0x28] sm:$0xff]
    %v544 = vld [vmem:[#allocation6 + $0x30] sm:$0xff]
    %v545 = vld [vmem:[#allocation6 + $0x38] sm:$0xff]
    %v546 = vld [vmem:[#allocation6 + $0x40] sm:$0xff]
    %v547 = vld [vmem:[#allocation6 + $0x48] sm:$0xff]
    %v548 = vld [vmem:[#allocation6 + $0x50] sm:$0xff]
    %v549 = vld [vmem:[#allocation6 + $0x58] sm:$0xff]
    %v550 = vld [vmem:[#allocation6 + $0x60] sm:$0xff]
    %v551 = vld [vmem:[#allocation6 + $0x68] sm:$0xff]
    %v552 = vld [vmem:[#allocation6 + $0x70] sm:$0xff]
    %v553 = vld [vmem:[#allocation6 + $0x78] sm:$0xff]
    %s554 = scalar_lea.vmem [#allocation3], 10
    %v555 = vld [vmem:[%s554] sm:$0x3]
    %556 = vmatprep.subr.mxu0 0.0
    %557 = vmatpush1.msra.mxu0 %v538
    %558 = vmatprep.subr.mxu0 0.0
    %559 = vmatpush1.msra.mxu0 %v539
    %560 = vmatprep.subr.mxu0 0.0
    %561 = vmatpush1.msra.mxu0 %v540
    %562 = vmatprep.subr.mxu0 0.0
    %563 = vmatpush1.msra.mxu0 %v541
    %564 = vmatprep.subr.mxu0 0.0
    %565 = vmatpush1.msra.mxu0 %v542
    %566 = vmatprep.subr.mxu0 0.0
    %567 = vmatpush1.msra.mxu0 %v543
    %568 = vmatprep.subr.mxu0 0.0
    %569 = vmatpush1.msra.mxu0 %v544
    %570 = vmatprep.subr.mxu0 0.0
    %571 = vmatpush1.msra.mxu0 %v545
    %572 = vmatprep.subr.mxu0 0.0
    %573 = vmatpush1.msra.mxu0 %v546
    %574 = vmatprep.subr.mxu0 0.0
    %575 = vmatpush1.msra.mxu0 %v547
    %576 = vmatprep.subr.mxu0 0.0
    %577 = vmatpush1.msra.mxu0 %v548
    %578 = vmatprep.subr.mxu0 0.0
    %579 = vmatpush1.msra.mxu0 %v549
    %580 = vmatprep.subr.mxu0 0.0
    %581 = vmatpush1.msra.mxu0 %v550
    %582 = vmatprep.subr.mxu0 0.0
    %583 = vmatpush1.msra.mxu0 %v551
    %584 = vmatprep.subr.mxu0 0.0
    %585 = vmatpush1.msra.mxu0 %v552
    %586 = vmatprep.subr.mxu0 0.0
    %587 = vmatpush1.msra.mxu0 %v553
    %588 = vmatprep.subr.mxu0 0.0
    %589 = vmatpush1.msra.mxu0 0.0
    %590 = vmatprep.subr.mxu0 0.0
    %591 = vmatpush1.msra.mxu0 0.0
    %592 = vmatprep.subr.mxu0 0.0
    %593 = vmatpush1.msra.mxu0 0.0
    %594 = vmatprep.subr.mxu0 0.0
    %595 = vmatpush1.msra.mxu0 0.0
    %596 = vmatprep.subr.mxu0 0.0
    %597 = vmatpush1.msra.mxu0 0.0
    %598 = vmatprep.subr.mxu0 0.0
    %599 = vmatpush1.msra.mxu0 0.0
    %600 = vmatprep.subr.mxu0 0.0
    %601 = vmatpush1.msra.mxu0 0.0
    %602 = vmatprep.subr.mxu0 0.0
    %603 = vmatpush1.msra.mxu0 0.0
    %604 = vmatprep.subr.mxu0 0.0
    %605 = vmatpush1.msra.mxu0 0.0
    %606 = vmatprep.subr.mxu0 0.0
    %607 = vmatpush1.msra.mxu0 0.0
    %608 = vmatprep.subr.mxu0 0.0
    %609 = vmatpush1.msra.mxu0 0.0
    %610 = vmatprep.subr.mxu0 0.0
    %611 = vmatpush1.msra.mxu0 0.0
    %612 = vmatprep.subr.mxu0 0.0
    %613 = vmatpush1.msra.mxu0 0.0
    %614 = vmatprep.subr.mxu0 0.0
    %615 = vmatpush1.msra.mxu0 0.0
    %616 = vmatprep.subr.mxu0 0.0
    %617 = vmatpush1.msra.mxu0 0.0
    %618 = vmatprep.subr.mxu0 0.0
    %619 = vmatpush1.msra.mxu0 0.0
    %620 = vmatprep.mubr.f32.mxu0 0.0
    %621 = vmatmul.mubr.f32.gmra.mrb[0].mxu0 %v535
    %v622 = vpop.f32.mrb[0].mxu0
    %v623 = vadd.f32 %v555, %v622
    %v624 = vpop.f32.mrb[0].mxu0
    %625 = vdwg.mxu0
    %v626 = vmul.f32 %v60, %v535
    %v627 = vmax.f32 %v623, 0.0
    %v628 = vmul.f32 %v67, %v627
    %v629 = vadd.f32 %v626, %v628
    %s630 = scalar_lea.vmem [#allocation8], 10
    %631 = vst [vmem:[%s630] sm:$0x3] %v629
    %v632 = vld [vmem:[#allocation6] sm:$0xff]
    %v633 = vld [vmem:[#allocation6 + $0x8] sm:$0xff]
    %v634 = vld [vmem:[#allocation6 + $0x10] sm:$0xff]
    %v635 = vld [vmem:[#allocation6 + $0x18] sm:$0xff]
    %v636 = vld [vmem:[#allocation6 + $0x20] sm:$0xff]
    %v637 = vld [vmem:[#allocation6 + $0x28] sm:$0xff]
    %v638 = vld [vmem:[#allocation6 + $0x30] sm:$0xff]
    %v639 = vld [vmem:[#allocation6 + $0x38] sm:$0xff]
    %v640 = vld [vmem:[#allocation6 + $0x40] sm:$0xff]
    %v641 = vld [vmem:[#allocation6 + $0x48] sm:$0xff]
    %v642 = vld [vmem:[#allocation6 + $0x50] sm:$0xff]
    %v643 = vld [vmem:[#allocation6 + $0x58] sm:$0xff]
    %v644 = vld [vmem:[#allocation6 + $0x60] sm:$0xff]
    %v645 = vld [vmem:[#allocation6 + $0x68] sm:$0xff]
    %v646 = vld [vmem:[#allocation6 + $0x70] sm:$0xff]
    %v647 = vld [vmem:[#allocation6 + $0x78] sm:$0xff]
    %s648 = scalar_lea.vmem [#allocation3], 12
    %v649 = vld [vmem:[%s648] sm:$0x3]
    %650 = vmatprep.subr.mxu0 0.0
    %651 = vmatpush1.msra.mxu0 %v632
    %652 = vmatprep.subr.mxu0 0.0
    %653 = vmatpush1.msra.mxu0 %v633
    %654 = vmatprep.subr.mxu0 0.0
    %655 = vmatpush1.msra.mxu0 %v634
    %656 = vmatprep.subr.mxu0 0.0
    %657 = vmatpush1.msra.mxu0 %v635
    %658 = vmatprep.subr.mxu0 0.0
    %659 = vmatpush1.msra.mxu0 %v636
    %660 = vmatprep.subr.mxu0 0.0
    %661 = vmatpush1.msra.mxu0 %v637
    %662 = vmatprep.subr.mxu0 0.0
    %663 = vmatpush1.msra.mxu0 %v638
    %664 = vmatprep.subr.mxu0 0.0
    %665 = vmatpush1.msra.mxu0 %v639
    %666 = vmatprep.subr.mxu0 0.0
    %667 = vmatpush1.msra.mxu0 %v640
    %668 = vmatprep.subr.mxu0 0.0
    %669 = vmatpush1.msra.mxu0 %v641
    %670 = vmatprep.subr.mxu0 0.0
    %671 = vmatpush1.msra.mxu0 %v642
    %672 = vmatprep.subr.mxu0 0.0
    %673 = vmatpush1.msra.mxu0 %v643
    %674 = vmatprep.subr.mxu0 0.0
    %675 = vmatpush1.msra.mxu0 %v644
    %676 = vmatprep.subr.mxu0 0.0
    %677 = vmatpush1.msra.mxu0 %v645
    %678 = vmatprep.subr.mxu0 0.0
    %679 = vmatpush1.msra.mxu0 %v646
    %680 = vmatprep.subr.mxu0 0.0
    %681 = vmatpush1.msra.mxu0 %v647
    %682 = vmatprep.subr.mxu0 0.0
    %683 = vmatpush1.msra.mxu0 0.0
    %684 = vmatprep.subr.mxu0 0.0
    %685 = vmatpush1.msra.mxu0 0.0
    %686 = vmatprep.subr.mxu0 0.0
    %687 = vmatpush1.msra.mxu0 0.0
    %688 = vmatprep.subr.mxu0 0.0
    %689 = vmatpush1.msra.mxu0 0.0
    %690 = vmatprep.subr.mxu0 0.0
    %691 = vmatpush1.msra.mxu0 0.0
    %692 = vmatprep.subr.mxu0 0.0
    %693 = vmatpush1.msra.mxu0 0.0
    %694 = vmatprep.subr.mxu0 0.0
    %695 = vmatpush1.msra.mxu0 0.0
    %696 = vmatprep.subr.mxu0 0.0
    %697 = vmatpush1.msra.mxu0 0.0
    %698 = vmatprep.subr.mxu0 0.0
    %699 = vmatpush1.msra.mxu0 0.0
    %700 = vmatprep.subr.mxu0 0.0
    %701 = vmatpush1.msra.mxu0 0.0
    %702 = vmatprep.subr.mxu0 0.0
    %703 = vmatpush1.msra.mxu0 0.0
    %704 = vmatprep.subr.mxu0 0.0
    %705 = vmatpush1.msra.mxu0 0.0
    %706 = vmatprep.subr.mxu0 0.0
    %707 = vmatpush1.msra.mxu0 0.0
    %708 = vmatprep.subr.mxu0 0.0
    %709 = vmatpush1.msra.mxu0 0.0
    %710 = vmatprep.subr.mxu0 0.0
    %711 = vmatpush1.msra.mxu0 0.0
    %712 = vmatprep.subr.mxu0 0.0
    %713 = vmatpush1.msra.mxu0 0.0
    %714 = vmatprep.mubr.f32.mxu0 0.0
    %715 = vmatmul.mubr.f32.gmra.mrb[0].mxu0 %v629
    %v716 = vpop.f32.mrb[0].mxu0
    %v717 = vadd.f32 %v649, %v716
    %v718 = vpop.f32.mrb[0].mxu0
    %719 = vdwg.mxu0
    %v720 = vmul.f32 %v60, %v629
    %v721 = vmax.f32 %v717, 0.0
    %v722 = vmul.f32 %v67, %v721
    %v723 = vadd.f32 %v720, %v722
    %s724 = scalar_lea.vmem [#allocation8], 12
    %725 = vst [vmem:[%s724] sm:$0x3] %v723
    %v726 = vld [vmem:[#allocation6] sm:$0xff]
    %v727 = vld [vmem:[#allocation6 + $0x8] sm:$0xff]
    %v728 = vld [vmem:[#allocation6 + $0x10] sm:$0xff]
    %v729 = vld [vmem:[#allocation6 + $0x18] sm:$0xff]
    %v730 = vld [vmem:[#allocation6 + $0x20] sm:$0xff]
    %v731 = vld [vmem:[#allocation6 + $0x28] sm:$0xff]
    %v732 = vld [vmem:[#allocation6 + $0x30] sm:$0xff]
    %v733 = vld [vmem:[#allocation6 + $0x38] sm:$0xff]
    %v734 = vld [vmem:[#allocation6 + $0x40] sm:$0xff]
    %v735 = vld [vmem:[#allocation6 + $0x48] sm:$0xff]
    %v736 = vld [vmem:[#allocation6 + $0x50] sm:$0xff]
    %v737 = vld [vmem:[#allocation6 + $0x58] sm:$0xff]
    %v738 = vld [vmem:[#allocation6 + $0x60] sm:$0xff]
    %v739 = vld [vmem:[#allocation6 + $0x68] sm:$0xff]
    %v740 = vld [vmem:[#allocation6 + $0x70] sm:$0xff]
    %v741 = vld [vmem:[#allocation6 + $0x78] sm:$0xff]
    %s742 = scalar_lea.vmem [#allocation3], 14
    %v743 = vld [vmem:[%s742] sm:$0x3]
    %744 = vmatprep.subr.mxu0 0.0
    %745 = vmatpush1.msra.mxu0 %v726
    %746 = vmatprep.subr.mxu0 0.0
    %747 = vmatpush1.msra.mxu0 %v727
    %748 = vmatprep.subr.mxu0 0.0
    %749 = vmatpush1.msra.mxu0 %v728
    %750 = vmatprep.subr.mxu0 0.0
    %751 = vmatpush1.msra.mxu0 %v729
    %752 = vmatprep.subr.mxu0 0.0
    %753 = vmatpush1.msra.mxu0 %v730
    %754 = vmatprep.subr.mxu0 0.0
    %755 = vmatpush1.msra.mxu0 %v731
    %756 = vmatprep.subr.mxu0 0.0
    %757 = vmatpush1.msra.mxu0 %v732
    %758 = vmatprep.subr.mxu0 0.0
    %759 = vmatpush1.msra.mxu0 %v733
    %760 = vmatprep.subr.mxu0 0.0
    %761 = vmatpush1.msra.mxu0 %v734
    %762 = vmatprep.subr.mxu0 0.0
    %763 = vmatpush1.msra.mxu0 %v735
    %764 = vmatprep.subr.mxu0 0.0
    %765 = vmatpush1.msra.mxu0 %v736
    %766 = vmatprep.subr.mxu0 0.0
    %767 = vmatpush1.msra.mxu0 %v737
    %768 = vmatprep.subr.mxu0 0.0
    %769 = vmatpush1.msra.mxu0 %v738
    %770 = vmatprep.subr.mxu0 0.0
    %771 = vmatpush1.msra.mxu0 %v739
    %772 = vmatprep.subr.mxu0 0.0
    %773 = vmatpush1.msra.mxu0 %v740
    %774 = vmatprep.subr.mxu0 0.0
    %775 = vmatpush1.msra.mxu0 %v741
    %776 = vmatprep.subr.mxu0 0.0
    %777 = vmatpush1.msra.mxu0 0.0
    %778 = vmatprep.subr.mxu0 0.0
    %779 = vmatpush1.msra.mxu0 0.0
    %780 = vmatprep.subr.mxu0 0.0
    %781 = vmatpush1.msra.mxu0 0.0
    %782 = vmatprep.subr.mxu0 0.0
    %783 = vmatpush1.msra.mxu0 0.0
    %784 = vmatprep.subr.mxu0 0.0
    %785 = vmatpush1.msra.mxu0 0.0
    %786 = vmatprep.subr.mxu0 0.0
    %787 = vmatpush1.msra.mxu0 0.0
    %788 = vmatprep.subr.mxu0 0.0
    %789 = vmatpush1.msra.mxu0 0.0
    %790 = vmatprep.subr.mxu0 0.0
    %791 = vmatpush1.msra.mxu0 0.0
    %792 = vmatprep.subr.mxu0 0.0
    %793 = vmatpush1.msra.mxu0 0.0
    %794 = vmatprep.subr.mxu0 0.0
    %795 = vmatpush1.msra.mxu0 0.0
    %796 = vmatprep.subr.mxu0 0.0
    %797 = vmatpush1.msra.mxu0 0.0
    %798 = vmatprep.subr.mxu0 0.0
    %799 = vmatpush1.msra.mxu0 0.0
    %800 = vmatprep.subr.mxu0 0.0
    %801 = vmatpush1.msra.mxu0 0.0
    %802 = vmatprep.subr.mxu0 0.0
    %803 = vmatpush1.msra.mxu0 0.0
    %804 = vmatprep.subr.mxu0 0.0
    %805 = vmatpush1.msra.mxu0 0.0
    %806 = vmatprep.subr.mxu0 0.0
    %807 = vmatpush1.msra.mxu0 0.0
    %808 = vmatprep.mubr.f32.mxu0 0.0
    %809 = vmatmul.mubr.f32.gmra.mrb[0].mxu0 %v723
    %v810 = vpop.f32.mrb[0].mxu0
    %v811 = vadd.f32 %v743, %v810
    %v812 = vpop.f32.mrb[0].mxu0
    %813 = vdwg.mxu0
    %v814 = vmul.f32 %v60, %v723
    %v815 = vmax.f32 %v811, 0.0
    %v816 = vmul.f32 %v67, %v815
    %v817 = vadd.f32 %v814, %v816
    %s818 = scalar_lea.vmem [#allocation8], 14
    %819 = vst [vmem:[%s818] sm:$0x3] %v817
    %820 = vst [vmem:[#allocation2] sm:$0x3] %v817
    // Predicated region
    $region34: #{tpu_custom_call.1} parent=1 // pred_check
      _
    $region35: #{tpu_custom_call.1} parent=1 // pred_check_branch
      %822 = sbr.rel (0) target = $region37
    $region36: #{tpu_custom_call.1} parent=1 // pred_region
      %s824 = ssub.s32 256, 256
      %825 = vsyncadd [#allocation5], %s824
      %s826 = sshll.u32 [#allocation8], 4
      %s827 = int_to_ptr.vmem [resolvable:$true] %s826
      %832 = dma.vmem_to_hbm [thread:$0]  %s827, 256, %s5, [#allocation5], 32, 32, 2
    $region37: #{tpu_custom_call.1} parent=1 // pred_fallthru
      _
    // Predicated region
    $region38: #{tpu_custom_call.1} parent=1 // pred_check
      _
    $region39: #{tpu_custom_call.1} parent=1 // pred_check_branch
      %834 = sbr.rel (0) target = $region41
    $region40: #{tpu_custom_call.1} parent=1 // pred_region
      %835 = dma.done [#allocation5], 256
    $region41: #{tpu_custom_call.1} parent=1 // pred_fallthru
      _
    %836 = vsyncpa [#allocation4], 1
    %837 = vsyncpa [#allocation7], 1
    %838 = vsyncpa [#allocation5], 1

</llo_original>
